<compile_context>
chip_gen: v7x
topology: tpu7x:2x2x1
jax: 0.10.0
libtpu: 0.0.40
codegen_flags: <defaults>
</compile_context>

<pallas_src>
import jax
import jax.numpy as jnp
from jax.experimental import pallas as pl
from jax.experimental.pallas import tpu as pltpu

NOISE_MEAN = 0.0
NOISE_STDDEV = 1e-4

_LANE = 128
_SUBLANE = 8


def _round_up(x, m):
    return (x + m - 1) // m * m


def _pad2d(a, rows, cols):
    r, c = a.shape
    if r == rows and c == cols:
        return a
    return jnp.pad(a, ((0, rows - r), (0, cols - c)))


def _perturb_params(w1, b1, w2, b2, seed, noise_mean, noise_stddev):
    """param + randn_like(param) * stddev + mean  (matches add_noise)."""
    f32 = jnp.float32
    k1, k2, k3, k4 = jax.random.split(jax.random.PRNGKey(seed), 4)
    w1h = w1.astype(f32) + jax.random.normal(k1, w1.shape, f32) * noise_stddev + noise_mean
    b1h = b1.astype(f32) + jax.random.normal(k2, b1.shape, f32) * noise_stddev + noise_mean
    w2h = w2.astype(f32) + jax.random.normal(k3, w2.shape, f32) * noise_stddev + noise_mean
    b2h = b2.astype(f32) + jax.random.normal(k4, b2.shape, f32) * noise_stddev + noise_mean
    return w1h, b1h, w2h, b2h


def wp_mlp_kernel(x_ref, w1_ref, b1_ref, w2_ref, b2_ref,
                  w1h_ref, b1h_ref, w2h_ref, b2h_ref,
                  y_ref, yhat_ref):
    """One batch tile: clean pass + perturbed pass, all MXU work, f32 accum."""
    x = x_ref[...]                                   # (TILE_B, F_in)

    # Clean forward.
    h = jnp.dot(x, w1_ref[...], preferred_element_type=jnp.float32) + b1_ref[...]
    h = jnp.maximum(h, 0.0)
    y = jnp.dot(h, w2_ref[...], preferred_element_type=jnp.float32) + b2_ref[...]
    y_ref[...] = y.astype(y_ref.dtype)

    # Perturbed forward (perturbed weights were built once, outside the kernel).
    hh = jnp.dot(x, w1h_ref[...], preferred_element_type=jnp.float32) + b1h_ref[...]
    hh = jnp.maximum(hh, 0.0)
    yh = jnp.dot(hh, w2h_ref[...], preferred_element_type=jnp.float32) + b2h_ref[...]
    yhat_ref[...] = yh.astype(yhat_ref.dtype)


def weight_perturbation_forward(x, w1, b1, w2, b2, seed=0,
                                noise_mean=NOISE_MEAN, noise_stddev=NOISE_STDDEV):
    """Returns (y, y_hat), matching WeightPerturbation.forward for a 2-layer MLP."""
    f32 = jnp.float32
    B, F_in = x.shape
    H = w1.shape[1]
    F_out = w2.shape[1]

    Hp = _round_up(H, _LANE)
    Fp = _round_up(F_out, _LANE)

    # Batch tile: multiple of 8; >= 2 tiles when B >= 16 so both v7x TCs are
    # busy; capped at 512 to stay well inside VMEM on every generation.
    if B >= 16:
        tile_b = _round_up(pl.cdiv(B, 2), _SUBLANE)
    else:
        tile_b = _round_up(max(B, 1), _SUBLANE)
    tile_b = min(tile_b, 512)
    Bp = _round_up(B, tile_b)

    # Perturbed parameter set (noise drawn once per forward, host/XLA side).
    w1h, b1h, w2h, b2h = _perturb_params(w1, b1, w2, b2, seed,
                                         noise_mean, noise_stddev)

    # Pad to lane-dense shapes.  Padding is applied AFTER the perturbation, so
    # padded lanes/rows are exactly zero in both parameter sets -> no masks.
    x_p = x.astype(f32)
    if Bp != B:
        x_p = jnp.zeros((Bp, F_in), f32).at[:B].set(x_p)
    w1_p = _pad2d(w1.astype(f32), F_in, Hp)
    b1_p = _pad2d(b1.reshape(1, -1).astype(f32), 1, Hp)
    w2_p = _pad2d(w2.astype(f32), Hp, Fp)
    b2_p = _pad2d(b2.reshape(1, -1).astype(f32), 1, Fp)
    w1h_p = _pad2d(w1h, F_in, Hp)
    b1h_p = _pad2d(b1h.reshape(1, -1), 1, Hp)
    w2h_p = _pad2d(w2h, Hp, Fp)
    b2h_p = _pad2d(b2h.reshape(1, -1), 1, Fp)

    grid = (Bp // tile_b,)
    # Constant block index -> weights/biases are fetched once and stay
    # VMEM-resident across all batch tiles.
    const = lambda shape: pl.BlockSpec(shape, lambda i: (0, 0))

    y_p, yhat_p = pl.pallas_call(
        wp_mlp_kernel,
        out_shape=(jax.ShapeDtypeStruct((Bp, Fp), f32),
                   jax.ShapeDtypeStruct((Bp, Fp), f32)),
        grid_spec=pltpu.PrefetchScalarGridSpec(
            num_scalar_prefetch=0,
            grid=grid,
            in_specs=[
                pl.BlockSpec((tile_b, F_in), lambda i: (i, 0)),   # x tile
                const((F_in, Hp)),                                # w1
                const((1, Hp)),                                   # b1
                const((Hp, Fp)),                                  # w2
                const((1, Fp)),                                   # b2
                const((F_in, Hp)),                                # w1_hat
                const((1, Hp)),                                   # b1_hat
                const((Hp, Fp)),                                  # w2_hat
                const((1, Fp)),                                   # b2_hat
            ],
            out_specs=[
                pl.BlockSpec((tile_b, Fp), lambda i: (i, 0)),     # y
                pl.BlockSpec((tile_b, Fp), lambda i: (i, 0)),     # y_hat
            ],
        ),
        compiler_params=pltpu.CompilerParams(
            dimension_semantics=("parallel",),        # batch tiles split across TCs
            vmem_limit_bytes=48 * 1024 * 1024,        # headroom under v7x's 64 MiB
        ),
    )(x_p, w1_p, b1_p, w2_p, b2_p, w1h_p, b1h_p, w2h_p, b2h_p)

    return y_p[:B, :F_out], yhat_p[:B, :F_out]


if __name__ == "__main__":
    key = jax.random.PRNGKey(0)
    kx, kw1, kb1, kw2, kb2 = jax.random.split(key, 5)

    B, F_in, H, F_out = 8, 32, 32, 16
    SEED = 1234

    x = jax.random.normal(kx, (B, F_in), dtype=jnp.float32)
    w1 = jax.random.normal(kw1, (F_in, H), dtype=jnp.float32) * 0.1
    b1 = jax.random.normal(kb1, (H,), dtype=jnp.float32) * 0.1
    w2 = jax.random.normal(kw2, (H, F_out), dtype=jnp.float32) * 0.1
    b2 = jax.random.normal(kb2, (F_out,), dtype=jnp.float32) * 0.1

    y, y_hat = weight_perturbation_forward(x, w1, b1, w2, b2, seed=SEED)
    jax.block_until_ready((y, y_hat))

    # Clean pass vs. pure-JAX reference.
    y_ref = jnp.maximum(x @ w1 + b1[None, :], 0.0) @ w2 + b2[None, :]
    assert jnp.allclose(y, y_ref, atol=1e-5, rtol=1e-5), "clean pass mismatch"

    # Perturbed pass vs. pure-JAX reference built with the identical noise.
    w1h, b1h, w2h, b2h = _perturb_params(w1, b1, w2, b2, SEED,
                                         NOISE_MEAN, NOISE_STDDEV)
    yh_ref = jnp.maximum(x @ w1h + b1h[None, :], 0.0) @ w2h + b2h[None, :]
    assert jnp.allclose(y_hat, yh_ref, atol=1e-5, rtol=1e-5), "perturbed pass mismatch"

    # Perturbation applied, small (stddev-scaled) but nonzero.
    diff = jnp.max(jnp.abs(y_hat - y))
    assert diff > 1e-7, "perturbation was not applied (y_hat == y)"
    assert diff < 0.05, f"perturbation too large ({diff}); noise scaling broken"

    # Same seed -> identical perturbed model (deterministic across calls/tiles).
    _, y_hat2 = weight_perturbation_forward(x, w1, b1, w2, b2, seed=SEED)
    assert jnp.array_equal(y_hat, y_hat2), "seeded noise not deterministic"

    print("KERNEL_OK")
</pallas_src>

<mosaic_0001>
module attributes {stable_mosaic.version = 11 : i64} {
  func.func @wp_mlp_kernel(%arg0: i32, %arg1: memref<8x32xf32, #tpu.memory_space<vmem>>, %arg2: memref<32x128xf32, #tpu.memory_space<vmem>>, %arg3: memref<1x128xf32, #tpu.memory_space<vmem>>, %arg4: memref<128x128xf32, #tpu.memory_space<vmem>>, %arg5: memref<1x128xf32, #tpu.memory_space<vmem>>, %arg6: memref<32x128xf32, #tpu.memory_space<vmem>>, %arg7: memref<1x128xf32, #tpu.memory_space<vmem>>, %arg8: memref<128x128xf32, #tpu.memory_space<vmem>>, %arg9: memref<1x128xf32, #tpu.memory_space<vmem>>, %arg10: memref<8x128xf32, #tpu.memory_space<vmem>>, %arg11: memref<8x128xf32, #tpu.memory_space<vmem>>) attributes {dimension_semantics = [#tpu.dimension_semantics<parallel>], iteration_bounds = array<i64: 1>, scalar_prefetch = 0 : i64, scratch_operands = 0 : i64, tpu.core_type = #tpu.core_type<tc>, window_params = [{transform_indices = @transform_0, window_bounds = array<i64: 8, 32>}, {pipeline_mode = #tpu.pipeline_mode<synchronous>, transform_indices = @transform_1, window_bounds = array<i64: 32, 128>}, {pipeline_mode = #tpu.pipeline_mode<synchronous>, transform_indices = @transform_2, window_bounds = array<i64: 1, 128>}, {pipeline_mode = #tpu.pipeline_mode<synchronous>, transform_indices = @transform_3, window_bounds = array<i64: 128, 128>}, {pipeline_mode = #tpu.pipeline_mode<synchronous>, transform_indices = @transform_4, window_bounds = array<i64: 1, 128>}, {pipeline_mode = #tpu.pipeline_mode<synchronous>, transform_indices = @transform_5, window_bounds = array<i64: 32, 128>}, {pipeline_mode = #tpu.pipeline_mode<synchronous>, transform_indices = @transform_6, window_bounds = array<i64: 1, 128>}, {pipeline_mode = #tpu.pipeline_mode<synchronous>, transform_indices = @transform_7, window_bounds = array<i64: 128, 128>}, {pipeline_mode = #tpu.pipeline_mode<synchronous>, transform_indices = @transform_8, window_bounds = array<i64: 1, 128>}, {transform_indices = @transform_9, window_bounds = array<i64: 8, 128>}, {transform_indices = @transform_10, window_bounds = array<i64: 8, 128>}]} {
    %c0 = arith.constant 0 : index
    %c0_0 = arith.constant 0 : index
    %0 = vector.load %arg1[%c0, %c0_0] : memref<8x32xf32, #tpu.memory_space<vmem>>, vector<8x32xf32>
    %c0_1 = arith.constant 0 : index
    %c0_2 = arith.constant 0 : index
    %1 = vector.load %arg2[%c0_1, %c0_2] : memref<32x128xf32, #tpu.memory_space<vmem>>, vector<32x128xf32>
    %cst = arith.constant dense<0.000000e+00> : vector<8x128xf32>
    %2 = tpu.matmul %0, %1, %cst {dimension_numbers = #tpu.dot_dimension_numbers<[1], [0], [0], [1], [0, 0, 1, 1], [], []>} : vector<8x32xf32>, vector<32x128xf32>, vector<8x128xf32> -> vector<8x128xf32>
    %c0_3 = arith.constant 0 : index
    %c0_4 = arith.constant 0 : index
    %3 = vector.load %arg3[%c0_3, %c0_4] : memref<1x128xf32, #tpu.memory_space<vmem>>, vector<1x128xf32>
    %4 = vector.broadcast %3 : vector<1x128xf32> to vector<8x128xf32>
    %5 = arith.addf %2, %4 : vector<8x128xf32>
    %cst_5 = arith.constant 0.000000e+00 : f32
    %6 = vector.broadcast %cst_5 : f32 to vector<8x128xf32>
    %7 = arith.maximumf %5, %6 : vector<8x128xf32>
    %c0_6 = arith.constant 0 : index
    %c0_7 = arith.constant 0 : index
    %8 = vector.load %arg4[%c0_6, %c0_7] : memref<128x128xf32, #tpu.memory_space<vmem>>, vector<128x128xf32>
    %cst_8 = arith.constant dense<0.000000e+00> : vector<8x128xf32>
    %9 = tpu.matmul %7, %8, %cst_8 {dimension_numbers = #tpu.dot_dimension_numbers<[1], [0], [0], [1], [0, 0, 1, 1], [], []>} : vector<8x128xf32>, vector<128x128xf32>, vector<8x128xf32> -> vector<8x128xf32>
    %c0_9 = arith.constant 0 : index
    %c0_10 = arith.constant 0 : index
    %10 = vector.load %arg5[%c0_9, %c0_10] : memref<1x128xf32, #tpu.memory_space<vmem>>, vector<1x128xf32>
    %11 = vector.broadcast %10 : vector<1x128xf32> to vector<8x128xf32>
    %12 = arith.addf %9, %11 : vector<8x128xf32>
    %c0_11 = arith.constant 0 : index
    %c0_12 = arith.constant 0 : index
    %13 = vector.load %arg10[%c0_11, %c0_12] : memref<8x128xf32, #tpu.memory_space<vmem>>, vector<8x128xf32>
    tpu.vector_store %arg10[%c0_11, %c0_12], %12 {strides = array<i32>} : memref<8x128xf32, #tpu.memory_space<vmem>>, vector<8x128xf32>,
    %c0_13 = arith.constant 0 : index
    %c0_14 = arith.constant 0 : index
    %14 = vector.load %arg6[%c0_13, %c0_14] : memref<32x128xf32, #tpu.memory_space<vmem>>, vector<32x128xf32>
    %cst_15 = arith.constant dense<0.000000e+00> : vector<8x128xf32>
    %15 = tpu.matmul %0, %14, %cst_15 {dimension_numbers = #tpu.dot_dimension_numbers<[1], [0], [0], [1], [0, 0, 1, 1], [], []>} : vector<8x32xf32>, vector<32x128xf32>, vector<8x128xf32> -> vector<8x128xf32>
    %c0_16 = arith.constant 0 : index
    %c0_17 = arith.constant 0 : index
    %16 = vector.load %arg7[%c0_16, %c0_17] : memref<1x128xf32, #tpu.memory_space<vmem>>, vector<1x128xf32>
    %17 = vector.broadcast %16 : vector<1x128xf32> to vector<8x128xf32>
    %18 = arith.addf %15, %17 : vector<8x128xf32>
    %cst_18 = arith.constant 0.000000e+00 : f32
    %19 = vector.broadcast %cst_18 : f32 to vector<8x128xf32>
    %20 = arith.maximumf %18, %19 : vector<8x128xf32>
    %c0_19 = arith.constant 0 : index
    %c0_20 = arith.constant 0 : index
    %21 = vector.load %arg8[%c0_19, %c0_20] : memref<128x128xf32, #tpu.memory_space<vmem>>, vector<128x128xf32>
    %cst_21 = arith.constant dense<0.000000e+00> : vector<8x128xf32>
    %22 = tpu.matmul %20, %21, %cst_21 {dimension_numbers = #tpu.dot_dimension_numbers<[1], [0], [0], [1], [0, 0, 1, 1], [], []>} : vector<8x128xf32>, vector<128x128xf32>, vector<8x128xf32> -> vector<8x128xf32>
    %c0_22 = arith.constant 0 : index
    %c0_23 = arith.constant 0 : index
    %23 = vector.load %arg9[%c0_22, %c0_23] : memref<1x128xf32, #tpu.memory_space<vmem>>, vector<1x128xf32>
    %24 = vector.broadcast %23 : vector<1x128xf32> to vector<8x128xf32>
    %25 = arith.addf %22, %24 : vector<8x128xf32>
    %c0_24 = arith.constant 0 : index
    %c0_25 = arith.constant 0 : index
    %26 = vector.load %arg11[%c0_24, %c0_25] : memref<8x128xf32, #tpu.memory_space<vmem>>, vector<8x128xf32>
    tpu.vector_store %arg11[%c0_24, %c0_25], %25 {strides = array<i32>} : memref<8x128xf32, #tpu.memory_space<vmem>>, vector<8x128xf32>,
    return
  }
  func.func @transform_0(%arg0: i32) -> (i32, i32) {
    %c0_i32 = arith.constant 0 : i32
    %c0_i32_0 = arith.constant 0 : i32
    return %arg0, %c0_i32 : i32, i32
  }
  func.func @transform_1(%arg0: i32) -> (i32, i32) {
    %c0_i32 = arith.constant 0 : i32
    %c0_i32_0 = arith.constant 0 : i32
    %c0_i32_1 = arith.constant 0 : i32
    return %c0_i32, %c0_i32_0 : i32, i32
  }
  func.func @transform_2(%arg0: i32) -> (i32, i32) {
    %c0_i32 = arith.constant 0 : i32
    %c0_i32_0 = arith.constant 0 : i32
    %c0_i32_1 = arith.constant 0 : i32
    return %c0_i32, %c0_i32_0 : i32, i32
  }
  func.func @transform_3(%arg0: i32) -> (i32, i32) {
    %c0_i32 = arith.constant 0 : i32
    %c0_i32_0 = arith.constant 0 : i32
    %c0_i32_1 = arith.constant 0 : i32
    return %c0_i32, %c0_i32_0 : i32, i32
  }
  func.func @transform_4(%arg0: i32) -> (i32, i32) {
    %c0_i32 = arith.constant 0 : i32
    %c0_i32_0 = arith.constant 0 : i32
    %c0_i32_1 = arith.constant 0 : i32
    return %c0_i32, %c0_i32_0 : i32, i32
  }
  func.func @transform_5(%arg0: i32) -> (i32, i32) {
    %c0_i32 = arith.constant 0 : i32
    %c0_i32_0 = arith.constant 0 : i32
    %c0_i32_1 = arith.constant 0 : i32
    return %c0_i32, %c0_i32_0 : i32, i32
  }
  func.func @transform_6(%arg0: i32) -> (i32, i32) {
    %c0_i32 = arith.constant 0 : i32
    %c0_i32_0 = arith.constant 0 : i32
    %c0_i32_1 = arith.constant 0 : i32
    return %c0_i32, %c0_i32_0 : i32, i32
  }
  func.func @transform_7(%arg0: i32) -> (i32, i32) {
    %c0_i32 = arith.constant 0 : i32
    %c0_i32_0 = arith.constant 0 : i32
    %c0_i32_1 = arith.constant 0 : i32
    return %c0_i32, %c0_i32_0 : i32, i32
  }
  func.func @transform_8(%arg0: i32) -> (i32, i32) {
    %c0_i32 = arith.constant 0 : i32
    %c0_i32_0 = arith.constant 0 : i32
    %c0_i32_1 = arith.constant 0 : i32
    return %c0_i32, %c0_i32_0 : i32, i32
  }
  func.func @transform_9(%arg0: i32) -> (i32, i32) {
    %c0_i32 = arith.constant 0 : i32
    %c0_i32_0 = arith.constant 0 : i32
    return %arg0, %c0_i32 : i32, i32
  }
  func.func @transform_10(%arg0: i32) -> (i32, i32) {
    %c0_i32 = arith.constant 0 : i32
    %c0_i32_0 = arith.constant 0 : i32
    return %arg0, %c0_i32 : i32, i32
  }
}

</mosaic_0001>

<llo_original>
// kernel: tpu_custom_call.1
$region0: #{tpu_custom_call.1}
  #allocation0 [shape = 'u32[]', space=smem, size = 0x4, offset = 0x4, fixed_abs, tag = 'smem constant byte address 0x4 - core index']
  #allocation1 [shape = 'u32[144,128]{1,0:T(1,128)}', space=vmem, size = 0x12000, scoped, tag = 'internal scratch']
  %s0 = inlined_call_operand.hbm [shape: f32[8,32], index: 0, kind: input, shape index: {}]
  %s1 = inlined_call_operand.hbm [shape: f32[32,128], index: 1, kind: input, shape index: {}]
  %s2 = inlined_call_operand.vmem [shape: f32[1,128], index: 2, kind: input, shape index: {}]
  %s3 = inlined_call_operand.hbm [shape: f32[128,128], index: 3, kind: input, shape index: {}]
  %s4 = inlined_call_operand.vmem [shape: f32[1,128], index: 4, kind: input, shape index: {}]
  %s5 = inlined_call_operand.hbm [shape: f32[32,128], index: 5, kind: input, shape index: {}]
  %s6 = inlined_call_operand.vmem [shape: f32[1,128], index: 6, kind: input, shape index: {}]
  %s7 = inlined_call_operand.hbm [shape: f32[128,128], index: 7, kind: input, shape index: {}]
  %s8 = inlined_call_operand.vmem [shape: f32[1,128], index: 8, kind: input, shape index: {}]
  %s9 = inlined_call_operand.hbm [shape: f32[8,128], index: 9, kind: output, shape index: {0}]
  %s10 = inlined_call_operand.hbm [shape: f32[8,128], index: 10, kind: output, shape index: {1}]
  %11 = xla_tuple %s9, %s10
  %s12 = sld [smem:[#allocation0]]
  $region74: #{tpu_custom_call.1} parent=0
    _
  %s14 = ssub.s32 1, %s12
  %s15 = scalar_select 0, %s14, %s12
  $region1: #{tpu_custom_call.1} parent=0
    #allocation2 [shape = 'u8[4096]{0}', space=vmem, size = 0x1000, scoped, tag = 'input window, operand 0, single buffered']
    #allocation3 [shape = 's32[1]{0}', space=sflag, size = 0x4, scoped, tag = 'scoped memory for tpu_custom_call.1']
    #allocation4 [shape = 's32[1]{0}', space=sflag, size = 0x4, scoped, tag = 'scoped memory for tpu_custom_call.1']
    #allocation5 [shape = 'u8[16384]{0}', space=vmem, size = 0x4000, scoped, tag = 'input window, operand 1, single buffered']
    #allocation6 [shape = 's32[1]{0}', space=sflag, size = 0x4, scoped, tag = 'scoped memory for tpu_custom_call.1']
    #allocation7 [shape = 'u8[65536]{0}', space=vmem, size = 0x10000, scoped, tag = 'input window, operand 3, single buffered']
    #allocation8 [shape = 'u8[16384]{0}', space=vmem, size = 0x4000, scoped, tag = 'input window, operand 5, single buffered']
    #allocation9 [shape = 's32[1]{0}', space=sflag, size = 0x4, scoped, tag = 'scoped memory for tpu_custom_call.1']
    #allocation10 [shape = 'u8[65536]{0}', space=vmem, size = 0x10000, scoped, tag = 'input window, operand 7, single buffered']
    #allocation11 [shape = 'u8[4096]{0}', space=vmem, size = 0x1000, scoped, tag = 'output window, operand 0, single buffered']
    #allocation12 [shape = 'u8[4096]{0}', space=vmem, size = 0x1000, scoped, tag = 'output window, operand 1, single buffered']
    #allocation13 [shape = 's32[1]{0}', space=sflag, size = 0x4, scoped, tag = 'scoped memory for tpu_custom_call.1']
    %16 = vsyncpa [#allocation3], 0
    %17 = vsyncpa [#allocation6], 0
    %18 = vsyncpa [#allocation9], 0
    %19 = vsyncpa [#allocation4], 0
    %20 = vsyncpa [#allocation13], 0
    // Predicated region
    $region2: #{tpu_custom_call.1} parent=1 // pred_check
      _
    $region3: #{tpu_custom_call.1} parent=1 // pred_check_branch
      %22 = sbr.rel (0) target = $region5
    $region4: #{tpu_custom_call.1} parent=1 // pred_region
      %s24 = ssub.s32 128, 128
      %25 = vsyncadd [#allocation3], %s24
      %s27 = sshll.u32 [#allocation2], 4
      %s28 = int_to_ptr.vmem [resolvable:$true] %s27
      %30 = dma.hbm_to_vmem [thread:$0]  %s0, 128, %s28, [#allocation3]
    $region5: #{tpu_custom_call.1} parent=1 // pred_fallthru
      _
    // Predicated region
    $region6: #{tpu_custom_call.1} parent=1 // pred_check
      _
    $region7: #{tpu_custom_call.1} parent=1 // pred_check_branch
      %32 = sbr.rel (0) target = $region9
    $region8: #{tpu_custom_call.1} parent=1 // pred_region
      %s34 = ssub.s32 512, 512
      %35 = vsyncadd [#allocation6], %s34
      %s36 = sshll.u32 [#allocation5], 4
      %s37 = int_to_ptr.vmem [resolvable:$true] %s36
      %42 = dma.hbm_to_vmem [thread:$0]  %s1, 512, %s37, [#allocation6], 128, 128, 8
    $region9: #{tpu_custom_call.1} parent=1 // pred_fallthru
      _
    // Predicated region
    $region10: #{tpu_custom_call.1} parent=1 // pred_check
      _
    $region11: #{tpu_custom_call.1} parent=1 // pred_check_branch
      %44 = sbr.rel (0) target = $region13
    $region12: #{tpu_custom_call.1} parent=1 // pred_region
      _
    $region13: #{tpu_custom_call.1} parent=1 // pred_fallthru
      _
    // Predicated region
    $region14: #{tpu_custom_call.1} parent=1 // pred_check
      _
    $region15: #{tpu_custom_call.1} parent=1 // pred_check_branch
      %46 = sbr.rel (0) target = $region17
    $region16: #{tpu_custom_call.1} parent=1 // pred_region
      %s48 = ssub.s32 2048, 2048
      %49 = vsyncadd [#allocation6], %s48
      %s50 = sshll.u32 [#allocation7], 4
      %s51 = int_to_ptr.vmem [resolvable:$true] %s50
      %56 = dma.hbm_to_vmem [thread:$0]  %s3, 2048, %s51, [#allocation6], 128, 128, 8
    $region17: #{tpu_custom_call.1} parent=1 // pred_fallthru
      _
    // Predicated region
    $region18: #{tpu_custom_call.1} parent=1 // pred_check
      _
    $region19: #{tpu_custom_call.1} parent=1 // pred_check_branch
      %58 = sbr.rel (0) target = $region21
    $region20: #{tpu_custom_call.1} parent=1 // pred_region
      _
    $region21: #{tpu_custom_call.1} parent=1 // pred_fallthru
      _
    // Predicated region
    $region22: #{tpu_custom_call.1} parent=1 // pred_check
      _
    $region23: #{tpu_custom_call.1} parent=1 // pred_check_branch
      %60 = sbr.rel (0) target = $region25
    $region24: #{tpu_custom_call.1} parent=1 // pred_region
      %s62 = ssub.s32 512, 512
      %63 = vsyncadd [#allocation9], %s62
      %s64 = sshll.u32 [#allocation8], 4
      %s65 = int_to_ptr.vmem [resolvable:$true] %s64
      %70 = dma.hbm_to_vmem [thread:$0]  %s5, 512, %s65, [#allocation9], 128, 128, 8
    $region25: #{tpu_custom_call.1} parent=1 // pred_fallthru
      _
    // Predicated region
    $region26: #{tpu_custom_call.1} parent=1 // pred_check
      _
    $region27: #{tpu_custom_call.1} parent=1 // pred_check_branch
      %72 = sbr.rel (0) target = $region29
    $region28: #{tpu_custom_call.1} parent=1 // pred_region
      _
    $region29: #{tpu_custom_call.1} parent=1 // pred_fallthru
      _
    // Predicated region
    $region30: #{tpu_custom_call.1} parent=1 // pred_check
      _
    $region31: #{tpu_custom_call.1} parent=1 // pred_check_branch
      %74 = sbr.rel (0) target = $region33
    $region32: #{tpu_custom_call.1} parent=1 // pred_region
      %s76 = ssub.s32 2048, 2048
      %77 = vsyncadd [#allocation9], %s76
      %s78 = sshll.u32 [#allocation10], 4
      %s79 = int_to_ptr.vmem [resolvable:$true] %s78
      %84 = dma.hbm_to_vmem [thread:$0]  %s7, 2048, %s79, [#allocation9], 128, 128, 8
    $region33: #{tpu_custom_call.1} parent=1 // pred_fallthru
      _
    // Predicated region
    $region34: #{tpu_custom_call.1} parent=1 // pred_check
      _
    $region35: #{tpu_custom_call.1} parent=1 // pred_check_branch
      %86 = sbr.rel (0) target = $region37
    $region36: #{tpu_custom_call.1} parent=1 // pred_region
      _
    $region37: #{tpu_custom_call.1} parent=1 // pred_fallthru
      _
    // Predicated region
    $region38: #{tpu_custom_call.1} parent=1 // pred_check
      _
    $region39: #{tpu_custom_call.1} parent=1 // pred_check_branch
      %88 = sbr.rel (0) target = $region41
    $region40: #{tpu_custom_call.1} parent=1 // pred_region
      %89 = dma.done [#allocation3], 128
    $region41: #{tpu_custom_call.1} parent=1 // pred_fallthru
      _
    // Predicated region
    $region42: #{tpu_custom_call.1} parent=1 // pred_check
      _
    $region43: #{tpu_custom_call.1} parent=1 // pred_check_branch
      %91 = sbr.rel (0) target = $region45
    $region44: #{tpu_custom_call.1} parent=1 // pred_region
      %92 = dma.done [#allocation6], 512
    $region45: #{tpu_custom_call.1} parent=1 // pred_fallthru
      _
    // Predicated region
    $region46: #{tpu_custom_call.1} parent=1 // pred_check
      _
    $region47: #{tpu_custom_call.1} parent=1 // pred_check_branch
      %94 = sbr.rel (0) target = $region49
    $region48: #{tpu_custom_call.1} parent=1 // pred_region
      %95 = dma.done [#allocation6], 2048
    $region49: #{tpu_custom_call.1} parent=1 // pred_fallthru
      _
    // Predicated region
    $region50: #{tpu_custom_call.1} parent=1 // pred_check
      _
    $region51: #{tpu_custom_call.1} parent=1 // pred_check_branch
      %97 = sbr.rel (0) target = $region53
    $region52: #{tpu_custom_call.1} parent=1 // pred_region
      %98 = dma.done [#allocation9], 512
    $region53: #{tpu_custom_call.1} parent=1 // pred_fallthru
      _
    // Predicated region
    $region54: #{tpu_custom_call.1} parent=1 // pred_check
      _
    $region55: #{tpu_custom_call.1} parent=1 // pred_check_branch
      %100 = sbr.rel (0) target = $region57
    $region56: #{tpu_custom_call.1} parent=1 // pred_region
      %101 = dma.done [#allocation9], 2048
    $region57: #{tpu_custom_call.1} parent=1 // pred_fallthru
      _
    %v102 = vld [vmem:[#allocation2] sm:$0xff]
    %v103 = vld [vmem:[#allocation5] sm:$0xff]
    %v104 = vld [vmem:[#allocation5 + $0x8] sm:$0xff]
    %v105 = vld [vmem:[#allocation5 + $0x10] sm:$0xff]
    %v106 = vld [vmem:[#allocation5 + $0x18] sm:$0xff]
    %v107 = vld [vmem:[%s2] sm:$0x1]
    %v109 = vlaneseq
    %v110 = vshrl.u32 %v109, 7
    %v111 = vsub.s32 0, %v110
    %v112 = vrot.slane %v107, %v111
    %vm114 = vcmask 261120
    %v116 = vsel %vm114, %v102, 0
    %118 = vmatprep.subr.mxu0 0.0
    %119 = vmatpush1.msra.mxu0 %v103
    %120 = vmatprep.subr.mxu0 0.0
    %121 = vmatpush1.msra.mxu0 %v104
    %122 = vmatprep.subr.mxu0 0.0
    %123 = vmatpush1.msra.mxu0 %v105
    %124 = vmatprep.subr.mxu0 0.0
    %125 = vmatpush1.msra.mxu0 %v106
    %126 = vmatprep.subr.mxu0 0.0
    %127 = vmatpush1.msra.mxu0 0.0
    %128 = vmatprep.subr.mxu0 0.0
    %129 = vmatpush1.msra.mxu0 0.0
    %130 = vmatprep.subr.mxu0 0.0
    %131 = vmatpush1.msra.mxu0 0.0
    %132 = vmatprep.subr.mxu0 0.0
    %133 = vmatpush1.msra.mxu0 0.0
    %134 = vmatprep.subr.mxu0 0.0
    %135 = vmatpush1.msra.mxu0 0.0
    %136 = vmatprep.subr.mxu0 0.0
    %137 = vmatpush1.msra.mxu0 0.0
    %138 = vmatprep.subr.mxu0 0.0
    %139 = vmatpush1.msra.mxu0 0.0
    %140 = vmatprep.subr.mxu0 0.0
    %141 = vmatpush1.msra.mxu0 0.0
    %142 = vmatprep.subr.mxu0 0.0
    %143 = vmatpush1.msra.mxu0 0.0
    %144 = vmatprep.subr.mxu0 0.0
    %145 = vmatpush1.msra.mxu0 0.0
    %146 = vmatprep.subr.mxu0 0.0
    %147 = vmatpush1.msra.mxu0 0.0
    %148 = vmatprep.subr.mxu0 0.0
    %149 = vmatpush1.msra.mxu0 0.0
    %150 = vmatprep.subr.mxu0 0.0
    %151 = vmatpush1.msra.mxu0 0.0
    %152 = vmatprep.subr.mxu0 0.0
    %153 = vmatpush1.msra.mxu0 0.0
    %154 = vmatprep.subr.mxu0 0.0
    %155 = vmatpush1.msra.mxu0 0.0
    %156 = vmatprep.subr.mxu0 0.0
    %157 = vmatpush1.msra.mxu0 0.0
    %158 = vmatprep.subr.mxu0 0.0
    %159 = vmatpush1.msra.mxu0 0.0
    %160 = vmatprep.subr.mxu0 0.0
    %161 = vmatpush1.msra.mxu0 0.0
    %162 = vmatprep.subr.mxu0 0.0
    %163 = vmatpush1.msra.mxu0 0.0
    %164 = vmatprep.subr.mxu0 0.0
    %165 = vmatpush1.msra.mxu0 0.0
    %166 = vmatprep.subr.mxu0 0.0
    %167 = vmatpush1.msra.mxu0 0.0
    %168 = vmatprep.subr.mxu0 0.0
    %169 = vmatpush1.msra.mxu0 0.0
    %170 = vmatprep.subr.mxu0 0.0
    %171 = vmatpush1.msra.mxu0 0.0
    %172 = vmatprep.subr.mxu0 0.0
    %173 = vmatpush1.msra.mxu0 0.0
    %174 = vmatprep.subr.mxu0 0.0
    %175 = vmatpush1.msra.mxu0 0.0
    %176 = vmatprep.subr.mxu0 0.0
    %177 = vmatpush1.msra.mxu0 0.0
    %178 = vmatprep.subr.mxu0 0.0
    %179 = vmatpush1.msra.mxu0 0.0
    %180 = vmatprep.subr.mxu0 0.0
    %181 = vmatpush1.msra.mxu0 0.0
    %182 = vmatprep.mubr.f32.mxu0 0.0
    %183 = vmatmul.mubr.f32.gmra.mrb[0].mxu0 %v116
    %v184 = vpop.f32.mrb[0].mxu0
    %v185 = vadd.f32 %v112, %v184
    %v186 = vpop.f32.mrb[0].mxu0
    %187 = vdwg.mxu0
    %v188 = vmax.f32 %v185, 0.0
    %v189 = vld [vmem:[#allocation7] sm:$0xff]
    %v190 = vld [vmem:[#allocation7 + $0x8] sm:$0xff]
    %v191 = vld [vmem:[#allocation7 + $0x10] sm:$0xff]
    %v192 = vld [vmem:[#allocation7 + $0x18] sm:$0xff]
    %v193 = vld [vmem:[#allocation7 + $0x20] sm:$0xff]
    %v194 = vld [vmem:[#allocation7 + $0x28] sm:$0xff]
    %v195 = vld [vmem:[#allocation7 + $0x30] sm:$0xff]
    %v196 = vld [vmem:[#allocation7 + $0x38] sm:$0xff]
    %v197 = vld [vmem:[#allocation7 + $0x40] sm:$0xff]
    %v198 = vld [vmem:[#allocation7 + $0x48] sm:$0xff]
    %v199 = vld [vmem:[#allocation7 + $0x50] sm:$0xff]
    %v200 = vld [vmem:[#allocation7 + $0x58] sm:$0xff]
    %v201 = vld [vmem:[#allocation7 + $0x60] sm:$0xff]
    %v202 = vld [vmem:[#allocation7 + $0x68] sm:$0xff]
    %v203 = vld [vmem:[#allocation7 + $0x70] sm:$0xff]
    %v204 = vld [vmem:[#allocation7 + $0x78] sm:$0xff]
    %v205 = vld [vmem:[%s4] sm:$0x1]
    %v207 = vlaneseq
    %v208 = vshrl.u32 %v207, 7
    %v209 = vsub.s32 0, %v208
    %v210 = vrot.slane %v205, %v209
    %212 = vmatprep.subr.mxu0 0.0
    %213 = vmatpush1.msra.mxu0 %v189
    %214 = vmatprep.subr.mxu0 0.0
    %215 = vmatpush1.msra.mxu0 %v190
    %216 = vmatprep.subr.mxu0 0.0
    %217 = vmatpush1.msra.mxu0 %v191
    %218 = vmatprep.subr.mxu0 0.0
    %219 = vmatpush1.msra.mxu0 %v192
    %220 = vmatprep.subr.mxu0 0.0
    %221 = vmatpush1.msra.mxu0 %v193
    %222 = vmatprep.subr.mxu0 0.0
    %223 = vmatpush1.msra.mxu0 %v194
    %224 = vmatprep.subr.mxu0 0.0
    %225 = vmatpush1.msra.mxu0 %v195
    %226 = vmatprep.subr.mxu0 0.0
    %227 = vmatpush1.msra.mxu0 %v196
    %228 = vmatprep.subr.mxu0 0.0
    %229 = vmatpush1.msra.mxu0 %v197
    %230 = vmatprep.subr.mxu0 0.0
    %231 = vmatpush1.msra.mxu0 %v198
    %232 = vmatprep.subr.mxu0 0.0
    %233 = vmatpush1.msra.mxu0 %v199
    %234 = vmatprep.subr.mxu0 0.0
    %235 = vmatpush1.msra.mxu0 %v200
    %236 = vmatprep.subr.mxu0 0.0
    %237 = vmatpush1.msra.mxu0 %v201
    %238 = vmatprep.subr.mxu0 0.0
    %239 = vmatpush1.msra.mxu0 %v202
    %240 = vmatprep.subr.mxu0 0.0
    %241 = vmatpush1.msra.mxu0 %v203
    %242 = vmatprep.subr.mxu0 0.0
    %243 = vmatpush1.msra.mxu0 %v204
    %244 = vmatprep.subr.mxu0 0.0
    %245 = vmatpush1.msra.mxu0 0.0
    %246 = vmatprep.subr.mxu0 0.0
    %247 = vmatpush1.msra.mxu0 0.0
    %248 = vmatprep.subr.mxu0 0.0
    %249 = vmatpush1.msra.mxu0 0.0
    %250 = vmatprep.subr.mxu0 0.0
    %251 = vmatpush1.msra.mxu0 0.0
    %252 = vmatprep.subr.mxu0 0.0
    %253 = vmatpush1.msra.mxu0 0.0
    %254 = vmatprep.subr.mxu0 0.0
    %255 = vmatpush1.msra.mxu0 0.0
    %256 = vmatprep.subr.mxu0 0.0
    %257 = vmatpush1.msra.mxu0 0.0
    %258 = vmatprep.subr.mxu0 0.0
    %259 = vmatpush1.msra.mxu0 0.0
    %260 = vmatprep.subr.mxu0 0.0
    %261 = vmatpush1.msra.mxu0 0.0
    %262 = vmatprep.subr.mxu0 0.0
    %263 = vmatpush1.msra.mxu0 0.0
    %264 = vmatprep.subr.mxu0 0.0
    %265 = vmatpush1.msra.mxu0 0.0
    %266 = vmatprep.subr.mxu0 0.0
    %267 = vmatpush1.msra.mxu0 0.0
    %268 = vmatprep.subr.mxu0 0.0
    %269 = vmatpush1.msra.mxu0 0.0
    %270 = vmatprep.subr.mxu0 0.0
    %271 = vmatpush1.msra.mxu0 0.0
    %272 = vmatprep.subr.mxu0 0.0
    %273 = vmatpush1.msra.mxu0 0.0
    %274 = vmatprep.subr.mxu0 0.0
    %275 = vmatpush1.msra.mxu0 0.0
    %276 = vmatprep.mubr.f32.mxu0 0.0
    %277 = vmatmul.mubr.f32.gmra.mrb[0].mxu0 %v188
    %v278 = vpop.f32.mrb[0].mxu0
    %v279 = vadd.f32 %v210, %v278
    %v280 = vpop.f32.mrb[0].mxu0
    %281 = vdwg.mxu0
    %282 = vst [vmem:[#allocation11] sm:$0xff] %v279
    %v283 = vld [vmem:[#allocation8] sm:$0xff]
    %v284 = vld [vmem:[#allocation8 + $0x8] sm:$0xff]
    %v285 = vld [vmem:[#allocation8 + $0x10] sm:$0xff]
    %v286 = vld [vmem:[#allocation8 + $0x18] sm:$0xff]
    %v287 = vld [vmem:[%s6] sm:$0x1]
    %v289 = vlaneseq
    %v290 = vshrl.u32 %v289, 7
    %v291 = vsub.s32 0, %v290
    %v292 = vrot.slane %v287, %v291
    %294 = vmatprep.subr.mxu0 0.0
    %295 = vmatpush1.msra.mxu0 %v283
    %296 = vmatprep.subr.mxu0 0.0
    %297 = vmatpush1.msra.mxu0 %v284
    %298 = vmatprep.subr.mxu0 0.0
    %299 = vmatpush1.msra.mxu0 %v285
    %300 = vmatprep.subr.mxu0 0.0
    %301 = vmatpush1.msra.mxu0 %v286
    %302 = vmatprep.subr.mxu0 0.0
    %303 = vmatpush1.msra.mxu0 0.0
    %304 = vmatprep.subr.mxu0 0.0
    %305 = vmatpush1.msra.mxu0 0.0
    %306 = vmatprep.subr.mxu0 0.0
    %307 = vmatpush1.msra.mxu0 0.0
    %308 = vmatprep.subr.mxu0 0.0
    %309 = vmatpush1.msra.mxu0 0.0
    %310 = vmatprep.subr.mxu0 0.0
    %311 = vmatpush1.msra.mxu0 0.0
    %312 = vmatprep.subr.mxu0 0.0
    %313 = vmatpush1.msra.mxu0 0.0
    %314 = vmatprep.subr.mxu0 0.0
    %315 = vmatpush1.msra.mxu0 0.0
    %316 = vmatprep.subr.mxu0 0.0
    %317 = vmatpush1.msra.mxu0 0.0
    %318 = vmatprep.subr.mxu0 0.0
    %319 = vmatpush1.msra.mxu0 0.0
    %320 = vmatprep.subr.mxu0 0.0
    %321 = vmatpush1.msra.mxu0 0.0
    %322 = vmatprep.subr.mxu0 0.0
    %323 = vmatpush1.msra.mxu0 0.0
    %324 = vmatprep.subr.mxu0 0.0
    %325 = vmatpush1.msra.mxu0 0.0
    %326 = vmatprep.subr.mxu0 0.0
    %327 = vmatpush1.msra.mxu0 0.0
    %328 = vmatprep.subr.mxu0 0.0
    %329 = vmatpush1.msra.mxu0 0.0
    %330 = vmatprep.subr.mxu0 0.0
    %331 = vmatpush1.msra.mxu0 0.0
    %332 = vmatprep.subr.mxu0 0.0
    %333 = vmatpush1.msra.mxu0 0.0
    %334 = vmatprep.subr.mxu0 0.0
    %335 = vmatpush1.msra.mxu0 0.0
    %336 = vmatprep.subr.mxu0 0.0
    %337 = vmatpush1.msra.mxu0 0.0
    %338 = vmatprep.subr.mxu0 0.0
    %339 = vmatpush1.msra.mxu0 0.0
    %340 = vmatprep.subr.mxu0 0.0
    %341 = vmatpush1.msra.mxu0 0.0
    %342 = vmatprep.subr.mxu0 0.0
    %343 = vmatpush1.msra.mxu0 0.0
    %344 = vmatprep.subr.mxu0 0.0
    %345 = vmatpush1.msra.mxu0 0.0
    %346 = vmatprep.subr.mxu0 0.0
    %347 = vmatpush1.msra.mxu0 0.0
    %348 = vmatprep.subr.mxu0 0.0
    %349 = vmatpush1.msra.mxu0 0.0
    %350 = vmatprep.subr.mxu0 0.0
    %351 = vmatpush1.msra.mxu0 0.0
    %352 = vmatprep.subr.mxu0 0.0
    %353 = vmatpush1.msra.mxu0 0.0
    %354 = vmatprep.subr.mxu0 0.0
    %355 = vmatpush1.msra.mxu0 0.0
    %356 = vmatprep.subr.mxu0 0.0
    %357 = vmatpush1.msra.mxu0 0.0
    %358 = vmatprep.mubr.f32.mxu0 0.0
    %359 = vmatmul.mubr.f32.gmra.mrb[0].mxu0 %v116
    %v360 = vpop.f32.mrb[0].mxu0
    %v361 = vadd.f32 %v292, %v360
    %v362 = vpop.f32.mrb[0].mxu0
    %363 = vdwg.mxu0
    %v364 = vmax.f32 %v361, 0.0
    %v365 = vld [vmem:[#allocation10] sm:$0xff]
    %v366 = vld [vmem:[#allocation10 + $0x8] sm:$0xff]
    %v367 = vld [vmem:[#allocation10 + $0x10] sm:$0xff]
    %v368 = vld [vmem:[#allocation10 + $0x18] sm:$0xff]
    %v369 = vld [vmem:[#allocation10 + $0x20] sm:$0xff]
    %v370 = vld [vmem:[#allocation10 + $0x28] sm:$0xff]
    %v371 = vld [vmem:[#allocation10 + $0x30] sm:$0xff]
    %v372 = vld [vmem:[#allocation10 + $0x38] sm:$0xff]
    %v373 = vld [vmem:[#allocation10 + $0x40] sm:$0xff]
    %v374 = vld [vmem:[#allocation10 + $0x48] sm:$0xff]
    %v375 = vld [vmem:[#allocation10 + $0x50] sm:$0xff]
    %v376 = vld [vmem:[#allocation10 + $0x58] sm:$0xff]
    %v377 = vld [vmem:[#allocation10 + $0x60] sm:$0xff]
    %v378 = vld [vmem:[#allocation10 + $0x68] sm:$0xff]
    %v379 = vld [vmem:[#allocation10 + $0x70] sm:$0xff]
    %v380 = vld [vmem:[#allocation10 + $0x78] sm:$0xff]
    %v381 = vld [vmem:[%s8] sm:$0x1]
    %v383 = vlaneseq
    %v384 = vshrl.u32 %v383, 7
    %v385 = vsub.s32 0, %v384
    %v386 = vrot.slane %v381, %v385
    %388 = vmatprep.subr.mxu0 0.0
    %389 = vmatpush1.msra.mxu0 %v365
    %390 = vmatprep.subr.mxu0 0.0
    %391 = vmatpush1.msra.mxu0 %v366
    %392 = vmatprep.subr.mxu0 0.0
    %393 = vmatpush1.msra.mxu0 %v367
    %394 = vmatprep.subr.mxu0 0.0
    %395 = vmatpush1.msra.mxu0 %v368
    %396 = vmatprep.subr.mxu0 0.0
    %397 = vmatpush1.msra.mxu0 %v369
    %398 = vmatprep.subr.mxu0 0.0
    %399 = vmatpush1.msra.mxu0 %v370
    %400 = vmatprep.subr.mxu0 0.0
    %401 = vmatpush1.msra.mxu0 %v371
    %402 = vmatprep.subr.mxu0 0.0
    %403 = vmatpush1.msra.mxu0 %v372
    %404 = vmatprep.subr.mxu0 0.0
    %405 = vmatpush1.msra.mxu0 %v373
    %406 = vmatprep.subr.mxu0 0.0
    %407 = vmatpush1.msra.mxu0 %v374
    %408 = vmatprep.subr.mxu0 0.0
    %409 = vmatpush1.msra.mxu0 %v375
    %410 = vmatprep.subr.mxu0 0.0
    %411 = vmatpush1.msra.mxu0 %v376
    %412 = vmatprep.subr.mxu0 0.0
    %413 = vmatpush1.msra.mxu0 %v377
    %414 = vmatprep.subr.mxu0 0.0
    %415 = vmatpush1.msra.mxu0 %v378
    %416 = vmatprep.subr.mxu0 0.0
    %417 = vmatpush1.msra.mxu0 %v379
    %418 = vmatprep.subr.mxu0 0.0
    %419 = vmatpush1.msra.mxu0 %v380
    %420 = vmatprep.subr.mxu0 0.0
    %421 = vmatpush1.msra.mxu0 0.0
    %422 = vmatprep.subr.mxu0 0.0
    %423 = vmatpush1.msra.mxu0 0.0
    %424 = vmatprep.subr.mxu0 0.0
    %425 = vmatpush1.msra.mxu0 0.0
    %426 = vmatprep.subr.mxu0 0.0
    %427 = vmatpush1.msra.mxu0 0.0
    %428 = vmatprep.subr.mxu0 0.0
    %429 = vmatpush1.msra.mxu0 0.0
    %430 = vmatprep.subr.mxu0 0.0
    %431 = vmatpush1.msra.mxu0 0.0
    %432 = vmatprep.subr.mxu0 0.0
    %433 = vmatpush1.msra.mxu0 0.0
    %434 = vmatprep.subr.mxu0 0.0
    %435 = vmatpush1.msra.mxu0 0.0
    %436 = vmatprep.subr.mxu0 0.0
    %437 = vmatpush1.msra.mxu0 0.0
    %438 = vmatprep.subr.mxu0 0.0
    %439 = vmatpush1.msra.mxu0 0.0
    %440 = vmatprep.subr.mxu0 0.0
    %441 = vmatpush1.msra.mxu0 0.0
    %442 = vmatprep.subr.mxu0 0.0
    %443 = vmatpush1.msra.mxu0 0.0
    %444 = vmatprep.subr.mxu0 0.0
    %445 = vmatpush1.msra.mxu0 0.0
    %446 = vmatprep.subr.mxu0 0.0
    %447 = vmatpush1.msra.mxu0 0.0
    %448 = vmatprep.subr.mxu0 0.0
    %449 = vmatpush1.msra.mxu0 0.0
    %450 = vmatprep.subr.mxu0 0.0
    %451 = vmatpush1.msra.mxu0 0.0
    %452 = vmatprep.mubr.f32.mxu0 0.0
    %453 = vmatmul.mubr.f32.gmra.mrb[0].mxu0 %v364
    %v454 = vpop.f32.mrb[0].mxu0
    %v455 = vadd.f32 %v386, %v454
    %v456 = vpop.f32.mrb[0].mxu0
    %457 = vdwg.mxu0
    %458 = vst [vmem:[#allocation12] sm:$0xff] %v455
    // Predicated region
    $region58: #{tpu_custom_call.1} parent=1 // pred_check
      _
    $region59: #{tpu_custom_call.1} parent=1 // pred_check_branch
      %460 = sbr.rel (0) target = $region61
    $region60: #{tpu_custom_call.1} parent=1 // pred_region
      %s462 = ssub.s32 128, 128
      %463 = vsyncadd [#allocation4], %s462
      %s465 = sshll.u32 [#allocation11], 4
      %s466 = int_to_ptr.vmem [resolvable:$true] %s465
      %468 = dma.vmem_to_hbm [thread:$0]  %s466, 128, %s9, [#allocation4]
    $region61: #{tpu_custom_call.1} parent=1 // pred_fallthru
      _
    // Predicated region
    $region62: #{tpu_custom_call.1} parent=1 // pred_check
      _
    $region63: #{tpu_custom_call.1} parent=1 // pred_check_branch
      %470 = sbr.rel (0) target = $region65
    $region64: #{tpu_custom_call.1} parent=1 // pred_region
      %s472 = ssub.s32 128, 128
      %473 = vsyncadd [#allocation13], %s472
      %s475 = sshll.u32 [#allocation12], 4
      %s476 = int_to_ptr.vmem [resolvable:$true] %s475
      %478 = dma.vmem_to_hbm [thread:$0]  %s476, 128, %s10, [#allocation13]
    $region65: #{tpu_custom_call.1} parent=1 // pred_fallthru
      _
    // Predicated region
    $region66: #{tpu_custom_call.1} parent=1 // pred_check
      _
    $region67: #{tpu_custom_call.1} parent=1 // pred_check_branch
      %480 = sbr.rel (0) target = $region69
    $region68: #{tpu_custom_call.1} parent=1 // pred_region
      %481 = dma.done [#allocation4], 128
    $region69: #{tpu_custom_call.1} parent=1 // pred_fallthru
      _
    // Predicated region
    $region70: #{tpu_custom_call.1} parent=1 // pred_check
      _
    $region71: #{tpu_custom_call.1} parent=1 // pred_check_branch
      %483 = sbr.rel (0) target = $region73
    $region72: #{tpu_custom_call.1} parent=1 // pred_region
      %484 = dma.done [#allocation13], 128
    $region73: #{tpu_custom_call.1} parent=1 // pred_fallthru
      _
    %485 = vsyncpa [#allocation3], 1
    %486 = vsyncpa [#allocation6], 1
    %487 = vsyncpa [#allocation9], 1
    %488 = vsyncpa [#allocation4], 1
    %489 = vsyncpa [#allocation13], 1

</llo_original>
